<compile_context>
chip_gen: v7x
topology: tpu7x:2x2x1
jax: 0.10.0
libtpu: 0.0.40
codegen_flags: <defaults>
</compile_context>

<pallas_src>
import math

import jax
import jax.numpy as jnp
from jax.experimental import pallas as pl
from jax.experimental.pallas import tpu as pltpu


def _round_up(x, m):
    return ((x + m - 1) // m) * m


# ---------------------------------------------------------------------------
# One-shot preprocess kernel (grid over HW tiles, batch-invariant):
#   [1x1-conv CNN reduce] -> base_k = (img+pe) @ wk, base_v = img @ wv
#   output: base_kv = concat(base_k, base_v) in bf16, consumed by the main kernel.
# ---------------------------------------------------------------------------
def _make_preprocess_kernel(use_cnn):
    bf16, f32 = jnp.bfloat16, jnp.float32

    def base_kv(img_f32, pe_ref, wk_ref, wv_ref, o_ref):
        base_k = jnp.dot((img_f32 + pe_ref[...]).astype(bf16), wk_ref[...],
                         preferred_element_type=f32)
        base_v = jnp.dot(img_f32.astype(bf16), wv_ref[...],
                         preferred_element_type=f32)
        o_ref[...] = jnp.concatenate([base_k, base_v], axis=-1).astype(bf16)

    if use_cnn:
        def kernel(img_ref, pe_ref, cw1_ref, cb1_ref, cw2_ref, cb2_ref,
                   wk_ref, wv_ref, o_ref):
            # two 1x1 convs + ReLU == per-pixel MLP
            h = jnp.maximum(
                jnp.dot(img_ref[...].astype(bf16), cw1_ref[...],
                        preferred_element_type=f32) + cb1_ref[...], 0.0)
            img = jnp.dot(h.astype(bf16), cw2_ref[...],
                          preferred_element_type=f32) + cb2_ref[...]
            base_kv(img, pe_ref, wk_ref, wv_ref, o_ref)
        return kernel

    def kernel(img_ref, pe_ref, wk_ref, wv_ref, o_ref):
        base_kv(img_ref[...].astype(f32), pe_ref, wk_ref, wv_ref, o_ref)
    return kernel


# ---------------------------------------------------------------------------
# Main fused kernel, grid = (B, n_hw_tiles), ("parallel", "arbitrary"):
#   cross-attention (transformer stand-in) with online softmax over HW tiles,
#   then fused block-diagonal box+iou heads -> one lane-dense (Tpad, 128) slab.
# ---------------------------------------------------------------------------
def _make_attention_head_kernel(C):
    bf16, f32 = jnp.bfloat16, jnp.float32

    def kernel(tok_ref, base_kv_ref, dense_ref, wq_ref, wkv_ref, wo_ref,
               hw1_ref, hb1_ref, hw2_ref, hb2_ref, hw3_ref, hb3_ref,
               o_ref, m_sc, l_sc, acc_sc):
        h = pl.program_id(1)

        @pl.when(h == 0)
        def _():
            m_sc[...] = jnp.full_like(m_sc, -jnp.inf)
            l_sc[...] = jnp.zeros_like(l_sc)
            acc_sc[...] = jnp.zeros_like(acc_sc)

        tok = tok_ref[...]                                                 # (Tpad, C) f32
        # attention scale is folded into wq at init -> no score-matrix multiply
        q = jnp.dot(tok.astype(bf16), wq_ref[...],
                    preferred_element_type=f32).astype(bf16)               # (Tpad, C)

        # fused 2C-wide k|v projection of the per-prompt dense embedding, added to the
        # batch-invariant precomputed base_kv = [(img+pe)@wk | img@wv].
        dkv = jnp.dot(dense_ref[...], wkv_ref[...],
                      preferred_element_type=f32)                          # (hw_tile, 2C)
        kv = base_kv_ref[...].astype(f32) + dkv
        k = kv[:, :C].astype(bf16)                                         # (hw_tile, C)
        v = kv[:, C:].astype(bf16)                                         # (hw_tile, C)

        s = jax.lax.dot_general(q, k, (((1,), (1,)), ((), ())),
                                preferred_element_type=f32)                # (Tpad, hw_tile)

        # online softmax (flash-style) across HW tiles
        m_prev = m_sc[...]
        m_new = jnp.maximum(m_prev, jnp.max(s, axis=-1, keepdims=True))
        alpha = jnp.exp(m_prev - m_new)
        p = jnp.exp(s - m_new)
        l_sc[...] = alpha * l_sc[...] + jnp.sum(p, axis=-1, keepdims=True)
        acc_sc[...] = alpha * acc_sc[...] + jnp.dot(p.astype(bf16), v,
                                                    preferred_element_type=f32)
        m_sc[...] = m_new

        @pl.when(h == pl.num_programs(1) - 1)
        def _():
            # TODO(synk): real BoxDecoder uses an externally injected SAM TwoWayTransformer;
            # a deterministic single cross-attention with the same (hs, src) interface is used.
            attn = acc_sc[...] * pl.reciprocal(l_sc[...], approx=True)     # (Tpad, C)
            hs = tok + jnp.dot(attn.astype(bf16), wo_ref[...],
                               preferred_element_type=f32)                 # (Tpad, C)

            # fused box + iou heads (block-diagonal weights, 128-lane-dense output)
            h1 = jnp.maximum(jnp.dot(hs.astype(bf16), hw1_ref[...],
                                     preferred_element_type=f32) + hb1_ref[...], 0.0)
            h2 = jnp.maximum(jnp.dot(h1.astype(bf16), hw2_ref[...],
                                     preferred_element_type=f32) + hb2_ref[...], 0.0)
            y = jnp.dot(h2.astype(bf16), hw3_ref[...],
                        preferred_element_type=f32) + hb3_ref[...]          # (Tpad, OP)

            # sigmoid only on the box-head columns (lanes 0..3)
            lane = jax.lax.broadcasted_iota(jnp.int32, y.shape, 1)
            y = jnp.where(lane < 4, jax.nn.sigmoid(y), y)
            o_ref[...] = y                                                  # full-width vst
    return kernel


# ---------------------------------------------------------------------------
# BoxDecoder wrapper (parameter setup + layout glue in plain JAX).
# ---------------------------------------------------------------------------
class BoxDecoderPallas:
    def __init__(self, key, transformer_dim=32, num_boxes=8,
                 box_head_hidden_dim=64, iou_head_hidden_dim=64):
        C, nb = transformer_dim, num_boxes
        self.C, self.num_boxes = C, nb
        keys = jax.random.split(key, 22)

        def init(k, shape, scale=0.05):
            return (scale * jax.random.normal(k, shape)).astype(jnp.float32)

        # token embeddings (kept f32; tiny)
        self.iou_token = init(keys[0], (1, C))
        self.box_tokens = init(keys[1], (nb, C))

        # CNN reduce_image_embedding: conv1 (2C -> 4C), conv2 (4C -> C); weights (in, out)
        self.cnn_w1 = init(keys[2], (2 * C, 4 * C)).astype(jnp.bfloat16)
        self.cnn_b1 = init(keys[3], (1, 4 * C))
        self.cnn_w2 = init(keys[4], (4 * C, C)).astype(jnp.bfloat16)
        self.cnn_b2 = init(keys[5], (1, C))

        # transformer stand-in projections (C-wide, no 128 zero-padding of the contraction)
        scale = 1.0 / math.sqrt(C)
        wq = init(keys[6], (C, C)); wk = init(keys[7], (C, C))
        wv = init(keys[8], (C, C)); wo = init(keys[9], (C, C))
        self.wq_s = (wq * scale).astype(jnp.bfloat16)       # attention scale folded in
        self.wk = wk.astype(jnp.bfloat16)
        self.wv = wv.astype(jnp.bfloat16)
        self.wkv = jnp.concatenate([wk, wv], axis=1).astype(jnp.bfloat16)   # fused 2C-wide
        self.wo = wo.astype(jnp.bfloat16)

        # box head (C->Hb->Hb->4, sigmoid) + iou head (C->Hi->Hi->nb) as one block-diagonal
        # wide MLP with a 128-lane-padded output: lanes [0:4]=box, [4:4+nb]=iou.
        Hb, Hi = box_head_hidden_dim, iou_head_hidden_dim
        H2 = Hb + Hi
        OP = max(128, _round_up(4 + nb, 128))
        self.out_pad = OP

        bw1 = init(keys[10], (C, Hb));  bb1 = init(keys[11], (Hb,))
        bw2 = init(keys[12], (Hb, Hb)); bb2 = init(keys[13], (Hb,))
        bw3 = init(keys[14], (Hb, 4));  bb3 = init(keys[15], (4,))
        iw1 = init(keys[16], (C, Hi));  ib1 = init(keys[17], (Hi,))
        iw2 = init(keys[18], (Hi, Hi)); ib2 = init(keys[19], (Hi,))
        iw3 = init(keys[20], (Hi, nb)); ib3 = init(keys[21], (nb,))

        self.head_w1 = jnp.concatenate([bw1, iw1], axis=1).astype(jnp.bfloat16)  # (C, H2)
        self.head_b1 = jnp.concatenate([bb1, ib1])[None, :]                      # (1, H2) f32
        w2 = jnp.zeros((H2, H2), jnp.float32).at[:Hb, :Hb].set(bw2).at[Hb:, Hb:].set(iw2)
        self.head_w2 = w2.astype(jnp.bfloat16)                                   # (H2, H2)
        self.head_b2 = jnp.concatenate([bb2, ib2])[None, :]                      # (1, H2) f32
        w3 = jnp.zeros((H2, OP), jnp.float32).at[:Hb, :4].set(bw3).at[Hb:, 4:4 + nb].set(iw3)
        self.head_w3 = w3.astype(jnp.bfloat16)                                   # (H2, OP)
        b3 = jnp.zeros((1, OP), jnp.float32).at[0, :4].set(bb3).at[0, 4:4 + nb].set(ib3)
        self.head_b3 = b3                                                        # (1, OP) f32

    def __call__(self, image_embeddings, image_pe, sparse_prompt_embeddings,
                 dense_prompt_embeddings):
        C, nb = self.C, self.num_boxes
        assert image_embeddings.shape[0] == 1 and image_pe.shape[0] == 1, \
            "batch-1 image embeddings assumed (standard SAM usage)"
        _, cin, H, W = image_embeddings.shape
        HW = H * W
        # matches torch: reduce only when the channel dim != transformer_dim
        use_cnn = (cin != C)

        # HW tiling: bounded VMEM independent of HW (critical on v7x / 64 MiB VMEM)
        if HW > 512:
            hw_tile = next((c for c in (512, 256, 128, 64, 32, 16, 8) if HW % c == 0), HW)
        else:
            hw_tile = HW
        n_hw = HW // hw_tile

        vmem_cap = 48 * 1024 * 1024

        # NCHW -> (pixels, channels); batch-1 image / pe are computed on ONCE.
        img2d = jnp.transpose(image_embeddings[0], (1, 2, 0)).reshape(HW, cin)
        pe2d = jnp.transpose(image_pe[0], (1, 2, 0)).reshape(HW, C)
        dense = jnp.transpose(dense_prompt_embeddings, (0, 2, 3, 1)).reshape(-1, HW, C)
        dense = dense.astype(jnp.bfloat16)

        # ---- one-shot preprocess: CNN reduce + batch-invariant k/v base projections ----
        pre_kernel = _make_preprocess_kernel(use_cnn)
        const_pre = lambda a: pl.BlockSpec(a.shape, lambda hh: (0, 0))
        pre_inputs = [img2d, pe2d]
        pre_specs = [pl.BlockSpec((hw_tile, cin), lambda hh: (hh, 0)),
                     pl.BlockSpec((hw_tile, C), lambda hh: (hh, 0))]
        if use_cnn:
            pre_inputs += [self.cnn_w1, self.cnn_b1, self.cnn_w2, self.cnn_b2]
            pre_specs += [const_pre(self.cnn_w1), const_pre(self.cnn_b1),
                          const_pre(self.cnn_w2), const_pre(self.cnn_b2)]
        pre_inputs += [self.wk, self.wv]
        pre_specs += [const_pre(self.wk), const_pre(self.wv)]

        base_kv = pl.pallas_call(
            pre_kernel,
            grid=(n_hw,),
            in_specs=pre_specs,
            out_specs=pl.BlockSpec((hw_tile, 2 * C), lambda hh: (hh, 0)),
            out_shape=jax.ShapeDtypeStruct((HW, 2 * C), jnp.bfloat16),
            compiler_params=pltpu.CompilerParams(
                dimension_semantics=("parallel",), vmem_limit_bytes=vmem_cap),
        )(*pre_inputs)

        # ---- token assembly (iou token + box tokens + sparse prompts), sublane-padded ----
        B = sparse_prompt_embeddings.shape[0]
        output_tokens = jnp.concatenate([self.iou_token, self.box_tokens], axis=0)
        output_tokens = jnp.broadcast_to(output_tokens[None], (B,) + output_tokens.shape)
        tokens = jnp.concatenate([output_tokens, sparse_prompt_embeddings], axis=1)
        T = tokens.shape[1]
        tpad = max(8, _round_up(T, 8))
        if tpad != T:
            tokens = jnp.pad(tokens, ((0, 0), (0, tpad - T), (0, 0)))

        # ---- per-batch fused attention + heads kernel ----
        kernel = _make_attention_head_kernel(C)
        OP = self.out_pad
        constw = lambda a: pl.BlockSpec(a.shape, lambda b, hh: (0, 0))

        out = pl.pallas_call(
            kernel,
            grid=(B, n_hw),
            in_specs=[
                pl.BlockSpec((None, tpad, C), lambda b, hh: (b, 0, 0)),       # tokens
                pl.BlockSpec((hw_tile, 2 * C), lambda b, hh: (hh, 0)),        # base_kv (shared)
                pl.BlockSpec((None, hw_tile, C), lambda b, hh: (b, hh, 0)),   # dense
                constw(self.wq_s), constw(self.wkv), constw(self.wo),
                constw(self.head_w1), constw(self.head_b1),
                constw(self.head_w2), constw(self.head_b2),
                constw(self.head_w3), constw(self.head_b3),
            ],
            out_specs=pl.BlockSpec((None, tpad, OP), lambda b, hh: (b, 0, 0)),
            out_shape=jax.ShapeDtypeStruct((B, tpad, OP), jnp.float32),
            scratch_shapes=[pltpu.VMEM((tpad, 1), jnp.float32),   # m (online softmax max)
                            pltpu.VMEM((tpad, 1), jnp.float32),   # l (online softmax sum)
                            pltpu.VMEM((tpad, C), jnp.float32)],  # acc
            compiler_params=pltpu.CompilerParams(
                dimension_semantics=("parallel", "arbitrary"),
                vmem_limit_bytes=vmem_cap),
        )(tokens, base_kv, dense,
          self.wq_s, self.wkv, self.wo,
          self.head_w1, self.head_b1, self.head_w2, self.head_b2,
          self.head_w3, self.head_b3)

        # Slice the lane-dense slab: rows 1..nb are box tokens, row 0 is the iou token.
        pred_boxes = out[:, 1:1 + nb, 0:4]            # (B, nb, 4)
        pred_logits = out[:, 0, 4:4 + nb]             # (B, nb)
        return {"pred_boxes": pred_boxes, "pred_logits": pred_logits}


if __name__ == "__main__":
    key = jax.random.PRNGKey(0)
    C, H, W = 32, 8, 8
    B, num_boxes, n_sparse = 2, 8, 4
    k1, k2, k3, k4, kparams = jax.random.split(key, 5)

    # image embeddings arrive with 2*C channels -> exercises the CNN reduce path
    image_embeddings = jax.random.normal(k1, (1, 2 * C, H, W), jnp.float32)
    image_pe = jax.random.normal(k2, (1, C, H, W), jnp.float32)
    sparse_prompt_embeddings = jax.random.normal(k3, (B, n_sparse, C), jnp.float32)
    dense_prompt_embeddings = jax.random.normal(k4, (B, C, H, W), jnp.float32)

    decoder = BoxDecoderPallas(kparams, transformer_dim=C, num_boxes=num_boxes,
                               box_head_hidden_dim=64, iou_head_hidden_dim=64)
    out = decoder(image_embeddings, image_pe, sparse_prompt_embeddings,
                  dense_prompt_embeddings)
    jax.block_until_ready(out)

    assert out["pred_boxes"].shape == (B, num_boxes, 4)
    assert out["pred_logits"].shape == (B, num_boxes)
    assert bool(jnp.all((out["pred_boxes"] >= 0.0) & (out["pred_boxes"] <= 1.0)))
    assert bool(jnp.all(jnp.isfinite(out["pred_logits"])))
    print("KERNEL_OK")
</pallas_src>

<mosaic_0001>
module attributes {stable_mosaic.version = 11 : i64} {
  func.func @kernel(%arg0: i32, %arg1: memref<64x64xf32, #tpu.memory_space<vmem>>, %arg2: memref<64x32xf32, #tpu.memory_space<vmem>>, %arg3: memref<64x128xbf16, #tpu.memory_space<vmem>>, %arg4: memref<1x128xf32, #tpu.memory_space<vmem>>, %arg5: memref<128x32xbf16, #tpu.memory_space<vmem>>, %arg6: memref<1x32xf32, #tpu.memory_space<vmem>>, %arg7: memref<32x32xbf16, #tpu.memory_space<vmem>>, %arg8: memref<32x32xbf16, #tpu.memory_space<vmem>>, %arg9: memref<64x64xbf16, #tpu.memory_space<vmem>>) attributes {dimension_semantics = [#tpu.dimension_semantics<parallel>], iteration_bounds = array<i64: 1>, scalar_prefetch = 0 : i64, scratch_operands = 0 : i64, tpu.core_type = #tpu.core_type<tc>, window_params = [{transform_indices = @transform_0, window_bounds = array<i64: 64, 64>}, {transform_indices = @transform_1, window_bounds = array<i64: 64, 32>}, {pipeline_mode = #tpu.pipeline_mode<synchronous>, transform_indices = @transform_2, window_bounds = array<i64: 64, 128>}, {pipeline_mode = #tpu.pipeline_mode<synchronous>, transform_indices = @transform_3, window_bounds = array<i64: 1, 128>}, {pipeline_mode = #tpu.pipeline_mode<synchronous>, transform_indices = @transform_4, window_bounds = array<i64: 128, 32>}, {pipeline_mode = #tpu.pipeline_mode<synchronous>, transform_indices = @transform_5, window_bounds = array<i64: 1, 32>}, {pipeline_mode = #tpu.pipeline_mode<synchronous>, transform_indices = @transform_6, window_bounds = array<i64: 32, 32>}, {pipeline_mode = #tpu.pipeline_mode<synchronous>, transform_indices = @transform_7, window_bounds = array<i64: 32, 32>}, {transform_indices = @transform_8, window_bounds = array<i64: 64, 64>}]} {
    %c0 = arith.constant 0 : index
    %c0_0 = arith.constant 0 : index
    %0 = vector.load %arg1[%c0, %c0_0] : memref<64x64xf32, #tpu.memory_space<vmem>>, vector<64x64xf32>
    %1 = arith.truncf %0 : vector<64x64xf32> to vector<64x64xbf16>
    %c0_1 = arith.constant 0 : index
    %c0_2 = arith.constant 0 : index
    %2 = vector.load %arg3[%c0_1, %c0_2] : memref<64x128xbf16, #tpu.memory_space<vmem>>, vector<64x128xbf16>
    %cst = arith.constant dense<0.000000e+00> : vector<64x128xf32>
    %3 = tpu.matmul %1, %2, %cst {dimension_numbers = #tpu.dot_dimension_numbers<[1], [0], [0], [1], [0, 0, 1, 1], [], []>} : vector<64x64xbf16>, vector<64x128xbf16>, vector<64x128xf32> -> vector<64x128xf32>
    %c0_3 = arith.constant 0 : index
    %c0_4 = arith.constant 0 : index
    %4 = vector.load %arg4[%c0_3, %c0_4] : memref<1x128xf32, #tpu.memory_space<vmem>>, vector<1x128xf32>
    %5 = vector.broadcast %4 : vector<1x128xf32> to vector<64x128xf32>
    %6 = arith.addf %3, %5 : vector<64x128xf32>
    %cst_5 = arith.constant 0.000000e+00 : f32
    %7 = vector.broadcast %cst_5 : f32 to vector<64x128xf32>
    %8 = arith.maximumf %6, %7 : vector<64x128xf32>
    %9 = arith.truncf %8 : vector<64x128xf32> to vector<64x128xbf16>
    %c0_6 = arith.constant 0 : index
    %c0_7 = arith.constant 0 : index
    %10 = vector.load %arg5[%c0_6, %c0_7] : memref<128x32xbf16, #tpu.memory_space<vmem>>, vector<128x32xbf16>
    %cst_8 = arith.constant dense<0.000000e+00> : vector<64x32xf32>
    %11 = tpu.matmul %9, %10, %cst_8 {dimension_numbers = #tpu.dot_dimension_numbers<[1], [0], [0], [1], [0, 0, 1, 1], [], []>} : vector<64x128xbf16>, vector<128x32xbf16>, vector<64x32xf32> -> vector<64x32xf32>
    %c0_9 = arith.constant 0 : index
    %c0_10 = arith.constant 0 : index
    %12 = vector.load %arg6[%c0_9, %c0_10] : memref<1x32xf32, #tpu.memory_space<vmem>>, vector<1x32xf32>
    %13 = vector.broadcast %12 : vector<1x32xf32> to vector<64x32xf32>
    %14 = arith.addf %11, %13 : vector<64x32xf32>
    %c0_11 = arith.constant 0 : index
    %c0_12 = arith.constant 0 : index
    %15 = vector.load %arg2[%c0_11, %c0_12] : memref<64x32xf32, #tpu.memory_space<vmem>>, vector<64x32xf32>
    %16 = arith.addf %14, %15 : vector<64x32xf32>
    %17 = arith.truncf %16 : vector<64x32xf32> to vector<64x32xbf16>
    %c0_13 = arith.constant 0 : index
    %c0_14 = arith.constant 0 : index
    %18 = vector.load %arg7[%c0_13, %c0_14] : memref<32x32xbf16, #tpu.memory_space<vmem>>, vector<32x32xbf16>
    %cst_15 = arith.constant dense<0.000000e+00> : vector<64x32xf32>
    %19 = tpu.matmul %17, %18, %cst_15 {dimension_numbers = #tpu.dot_dimension_numbers<[1], [0], [0], [1], [0, 0, 1, 1], [], []>} : vector<64x32xbf16>, vector<32x32xbf16>, vector<64x32xf32> -> vector<64x32xf32>
    %20 = arith.truncf %14 : vector<64x32xf32> to vector<64x32xbf16>
    %c0_16 = arith.constant 0 : index
    %c0_17 = arith.constant 0 : index
    %21 = vector.load %arg8[%c0_16, %c0_17] : memref<32x32xbf16, #tpu.memory_space<vmem>>, vector<32x32xbf16>
    %cst_18 = arith.constant dense<0.000000e+00> : vector<64x32xf32>
    %22 = tpu.matmul %20, %21, %cst_18 {dimension_numbers = #tpu.dot_dimension_numbers<[1], [0], [0], [1], [0, 0, 1, 1], [], []>} : vector<64x32xbf16>, vector<32x32xbf16>, vector<64x32xf32> -> vector<64x32xf32>
    %23 = tpu.concatenate %19, %22 in 1 : vector<64x32xf32>, vector<64x32xf32> -> vector<64x64xf32>
    %24 = arith.truncf %23 : vector<64x64xf32> to vector<64x64xbf16>
    %c0_19 = arith.constant 0 : index
    %c0_20 = arith.constant 0 : index
    %25 = vector.load %arg9[%c0_19, %c0_20] : memref<64x64xbf16, #tpu.memory_space<vmem>>, vector<64x64xbf16>
    tpu.vector_store %arg9[%c0_19, %c0_20], %24 {strides = array<i32>} : memref<64x64xbf16, #tpu.memory_space<vmem>>, vector<64x64xbf16>,
    return
  }
  func.func @transform_0(%arg0: i32) -> (i32, i32) {
    %c0_i32 = arith.constant 0 : i32
    %c0_i32_0 = arith.constant 0 : i32
    return %arg0, %c0_i32 : i32, i32
  }
  func.func @transform_1(%arg0: i32) -> (i32, i32) {
    %c0_i32 = arith.constant 0 : i32
    %c0_i32_0 = arith.constant 0 : i32
    return %arg0, %c0_i32 : i32, i32
  }
  func.func @transform_2(%arg0: i32) -> (i32, i32) {
    %c0_i32 = arith.constant 0 : i32
    %c0_i32_0 = arith.constant 0 : i32
    %c0_i32_1 = arith.constant 0 : i32
    return %c0_i32, %c0_i32_0 : i32, i32
  }
  func.func @transform_3(%arg0: i32) -> (i32, i32) {
    %c0_i32 = arith.constant 0 : i32
    %c0_i32_0 = arith.constant 0 : i32
    %c0_i32_1 = arith.constant 0 : i32
    return %c0_i32, %c0_i32_0 : i32, i32
  }
  func.func @transform_4(%arg0: i32) -> (i32, i32) {
    %c0_i32 = arith.constant 0 : i32
    %c0_i32_0 = arith.constant 0 : i32
    %c0_i32_1 = arith.constant 0 : i32
    return %c0_i32, %c0_i32_0 : i32, i32
  }
  func.func @transform_5(%arg0: i32) -> (i32, i32) {
    %c0_i32 = arith.constant 0 : i32
    %c0_i32_0 = arith.constant 0 : i32
    %c0_i32_1 = arith.constant 0 : i32
    return %c0_i32, %c0_i32_0 : i32, i32
  }
  func.func @transform_6(%arg0: i32) -> (i32, i32) {
    %c0_i32 = arith.constant 0 : i32
    %c0_i32_0 = arith.constant 0 : i32
    %c0_i32_1 = arith.constant 0 : i32
    return %c0_i32, %c0_i32_0 : i32, i32
  }
  func.func @transform_7(%arg0: i32) -> (i32, i32) {
    %c0_i32 = arith.constant 0 : i32
    %c0_i32_0 = arith.constant 0 : i32
    %c0_i32_1 = arith.constant 0 : i32
    return %c0_i32, %c0_i32_0 : i32, i32
  }
  func.func @transform_8(%arg0: i32) -> (i32, i32) {
    %c0_i32 = arith.constant 0 : i32
    %c0_i32_0 = arith.constant 0 : i32
    return %arg0, %c0_i32 : i32, i32
  }
}

</mosaic_0001>

<llo_original>
// kernel: tpu_custom_call.1
$region0: #{tpu_custom_call.1}
  #allocation0 [shape = 'u32[]', space=smem, size = 0x4, offset = 0x4, fixed_abs, tag = 'smem constant byte address 0x4 - core index']
  #allocation1 [shape = 'u32[144,128]{1,0:T(1,128)}', space=vmem, size = 0x12000, scoped, tag = 'internal scratch']
  %s0 = inlined_call_operand.vmem [shape: f32[64,64], index: 0, kind: input, shape index: {}]
  %s1 = inlined_call_operand.vmem [shape: f32[64,32], index: 1, kind: input, shape index: {}]
  %s2 = inlined_call_operand.vmem [shape: bf16[64,128], index: 2, kind: input, shape index: {}]
  %s3 = inlined_call_operand.vmem [shape: f32[1,128], index: 3, kind: input, shape index: {}]
  %s4 = inlined_call_operand.vmem [shape: bf16[128,32], index: 4, kind: input, shape index: {}]
  %s5 = inlined_call_operand.vmem [shape: f32[1,32], index: 5, kind: input, shape index: {}]
  %s6 = inlined_call_operand.vmem [shape: bf16[32,32], index: 6, kind: input, shape index: {}]
  %s7 = inlined_call_operand.vmem [shape: bf16[32,32], index: 7, kind: input, shape index: {}]
  %s8 = inlined_call_operand.hbm [shape: bf16[64,64], index: 8, kind: output, shape index: {}]
  %s9 = sld [smem:[#allocation0]]
  $region42: #{tpu_custom_call.1} parent=0
    _
  %s11 = ssub.s32 1, %s9
  %s12 = scalar_select 0, %s11, %s9
  $region1: #{tpu_custom_call.1} parent=0
    #allocation2 [shape = 'u8[16384]{0}', space=vmem, size = 0x4000, scoped, tag = 'output window, operand 0, single buffered']
    #allocation3 [shape = 's32[1]{0}', space=sflag, size = 0x4, scoped, tag = 'scoped memory for tpu_custom_call.1']
    %13 = vsyncpa [#allocation3], 0
    // Predicated region
    $region2: #{tpu_custom_call.1} parent=1 // pred_check
      _
    $region3: #{tpu_custom_call.1} parent=1 // pred_check_branch
      %15 = sbr.rel (0) target = $region5
    $region4: #{tpu_custom_call.1} parent=1 // pred_region
      _
    $region5: #{tpu_custom_call.1} parent=1 // pred_fallthru
      _
    // Predicated region
    $region6: #{tpu_custom_call.1} parent=1 // pred_check
      _
    $region7: #{tpu_custom_call.1} parent=1 // pred_check_branch
      %17 = sbr.rel (0) target = $region9
    $region8: #{tpu_custom_call.1} parent=1 // pred_region
      _
    $region9: #{tpu_custom_call.1} parent=1 // pred_fallthru
      _
    // Predicated region
    $region10: #{tpu_custom_call.1} parent=1 // pred_check
      _
    $region11: #{tpu_custom_call.1} parent=1 // pred_check_branch
      %19 = sbr.rel (0) target = $region13
    $region12: #{tpu_custom_call.1} parent=1 // pred_region
      _
    $region13: #{tpu_custom_call.1} parent=1 // pred_fallthru
      _
    // Predicated region
    $region14: #{tpu_custom_call.1} parent=1 // pred_check
      _
    $region15: #{tpu_custom_call.1} parent=1 // pred_check_branch
      %21 = sbr.rel (0) target = $region17
    $region16: #{tpu_custom_call.1} parent=1 // pred_region
      _
    $region17: #{tpu_custom_call.1} parent=1 // pred_fallthru
      _
    // Predicated region
    $region18: #{tpu_custom_call.1} parent=1 // pred_check
      _
    $region19: #{tpu_custom_call.1} parent=1 // pred_check_branch
      %23 = sbr.rel (0) target = $region21
    $region20: #{tpu_custom_call.1} parent=1 // pred_region
      _
    $region21: #{tpu_custom_call.1} parent=1 // pred_fallthru
      _
    // Predicated region
    $region22: #{tpu_custom_call.1} parent=1 // pred_check
      _
    $region23: #{tpu_custom_call.1} parent=1 // pred_check_branch
      %25 = sbr.rel (0) target = $region25
    $region24: #{tpu_custom_call.1} parent=1 // pred_region
      _
    $region25: #{tpu_custom_call.1} parent=1 // pred_fallthru
      _
    // Predicated region
    $region26: #{tpu_custom_call.1} parent=1 // pred_check
      _
    $region27: #{tpu_custom_call.1} parent=1 // pred_check_branch
      %27 = sbr.rel (0) target = $region29
    $region28: #{tpu_custom_call.1} parent=1 // pred_region
      _
    $region29: #{tpu_custom_call.1} parent=1 // pred_fallthru
      _
    // Predicated region
    $region30: #{tpu_custom_call.1} parent=1 // pred_check
      _
    $region31: #{tpu_custom_call.1} parent=1 // pred_check_branch
      %29 = sbr.rel (0) target = $region33
    $region32: #{tpu_custom_call.1} parent=1 // pred_region
      _
    $region33: #{tpu_custom_call.1} parent=1 // pred_fallthru
      _
    %v31 = vld [vmem:[%s0] sm:$0xff]
    %v32 = vld [vmem:[%s0 + $0x8] sm:$0xff]
    %v33 = vld [vmem:[%s0 + $0x10] sm:$0xff]
    %v34 = vld [vmem:[%s0 + $0x18] sm:$0xff]
    %v35 = vld [vmem:[%s0 + $0x20] sm:$0xff]
    %v36 = vld [vmem:[%s0 + $0x28] sm:$0xff]
    %v37 = vld [vmem:[%s0 + $0x30] sm:$0xff]
    %v38 = vld [vmem:[%s0 + $0x38] sm:$0xff]
    %v39 = vpack.c.bf16 %v32, %v31
    %v40 = vpack.c.bf16 %v34, %v33
    %v41 = vpack.c.bf16 %v36, %v35
    %v42 = vpack.c.bf16 %v38, %v37
    %v43 = vld [vmem:[%s2] sm:$0xf]
    %v44 = vld [vmem:[%s2 + $0x4] sm:$0xf]
    %v45 = vld [vmem:[%s2 + $0x8] sm:$0xf]
    %v46 = vld [vmem:[%s2 + $0xc] sm:$0xf]
    %v47 = vld [vmem:[%s2 + $0x10] sm:$0xf]
    %v48 = vld [vmem:[%s2 + $0x14] sm:$0xf]
    %v49 = vld [vmem:[%s2 + $0x18] sm:$0xf]
    %v50 = vld [vmem:[%s2 + $0x1c] sm:$0xf]
    %v51 = vld [vmem:[%s3] sm:$0x1]
    %v53 = vlaneseq
    %v54 = vshrl.u32 %v53, 7
    %v55 = vsub.s32 0, %v54
    %v56 = vrot.slane %v51, %v55
    %v66 = vunpack.c.l.b16 %v43
    %v67 = vunpack.c.l.b16 %v44
    %v68 = vunpack.c.l.b16 %v45
    %v69 = vunpack.c.l.b16 %v46
    %v70 = vunpack.c.l.b16 %v47
    %v71 = vunpack.c.l.b16 %v48
    %v72 = vunpack.c.l.b16 %v49
    %v73 = vunpack.c.l.b16 %v50
    %v74 = vpack.c.b16 %v67, %v66
    %v75 = vpack.c.b16 %v69, %v68
    %v76 = vpack.c.b16 %v71, %v70
    %v77 = vpack.c.b16 %v73, %v72
    %vm82 = vcmask 523264
    %v84 = vsel %vm82, %v39, 0
    %v87 = vsel %vm82, %v40, 0
    %v90 = vsel %vm82, %v41, 0
    %v93 = vsel %vm82, %v42, 0
    %95 = vmatprep.subr.bf16.mxu0 0
    %96 = vmatpush1.bf16.msra.mxu0 %v74
    %97 = vmatprep.subr.bf16.mxu0 0
    %98 = vmatpush1.bf16.msra.mxu0 %v75
    %99 = vmatprep.subr.bf16.mxu0 0
    %100 = vmatpush1.bf16.msra.mxu0 %v76
    %101 = vmatprep.subr.bf16.mxu0 0
    %102 = vmatpush1.bf16.msra.mxu0 %v77
    %103 = vmatprep.subr.bf16.mxu0 0
    %104 = vmatpush1.bf16.msra.mxu0 0
    %105 = vmatprep.subr.bf16.mxu0 0
    %106 = vmatpush1.bf16.msra.mxu0 0
    %107 = vmatprep.subr.bf16.mxu0 0
    %108 = vmatpush1.bf16.msra.mxu0 0
    %109 = vmatprep.subr.bf16.mxu0 0
    %110 = vmatpush1.bf16.msra.mxu0 0
    %111 = vmatprep.subr.bf16.mxu0 0
    %112 = vmatpush1.bf16.msra.mxu0 0
    %113 = vmatprep.subr.bf16.mxu0 0
    %114 = vmatpush1.bf16.msra.mxu0 0
    %115 = vmatprep.subr.bf16.mxu0 0
    %116 = vmatpush1.bf16.msra.mxu0 0
    %117 = vmatprep.subr.bf16.mxu0 0
    %118 = vmatpush1.bf16.msra.mxu0 0
    %119 = vmatprep.subr.bf16.mxu0 0
    %120 = vmatpush1.bf16.msra.mxu0 0
    %121 = vmatprep.subr.bf16.mxu0 0
    %122 = vmatpush1.bf16.msra.mxu0 0
    %123 = vmatprep.subr.bf16.mxu0 0
    %124 = vmatpush1.bf16.msra.mxu0 0
    %125 = vmatprep.subr.bf16.mxu0 0
    %126 = vmatpush1.bf16.msra.mxu0 0
    %127 = vmatprep.mubr.bf16.mxu0 0
    %128 = vmatmul.mubr.bf16.gmra.mrb[0].mxu0 %v84
    %v129 = vpop.f32.mrb[0].mxu0
    %v130 = vadd.f32 %v56, %v129
    %v131 = vpop.f32.mrb[0].mxu0
    %v132 = vpop.f32.mrb[0].mxu0
    %v133 = vadd.f32 %v56, %v132
    %v134 = vpop.f32.mrb[0].mxu0
    %135 = vmatprep.mubr.bf16.mxu0 0
    %136 = vmatmul.mubr.bf16.gmra.mrb[0].mxu0 %v87
    %v137 = vpop.f32.mrb[0].mxu0
    %v138 = vadd.f32 %v56, %v137
    %v139 = vpop.f32.mrb[0].mxu0
    %v140 = vpop.f32.mrb[0].mxu0
    %v141 = vadd.f32 %v56, %v140
    %v142 = vpop.f32.mrb[0].mxu0
    %143 = vmatprep.mubr.bf16.mxu0 0
    %144 = vmatmul.mubr.bf16.gmra.mrb[0].mxu0 %v90
    %v145 = vpop.f32.mrb[0].mxu0
    %v146 = vadd.f32 %v56, %v145
    %v147 = vpop.f32.mrb[0].mxu0
    %v148 = vpop.f32.mrb[0].mxu0
    %v149 = vadd.f32 %v56, %v148
    %v150 = vpop.f32.mrb[0].mxu0
    %151 = vmatprep.mubr.bf16.mxu0 0
    %152 = vmatmul.mubr.bf16.gmra.mrb[0].mxu0 %v93
    %v153 = vpop.f32.mrb[0].mxu0
    %v154 = vadd.f32 %v56, %v153
    %v155 = vpop.f32.mrb[0].mxu0
    %v156 = vpop.f32.mrb[0].mxu0
    %v157 = vadd.f32 %v56, %v156
    %v158 = vpop.f32.mrb[0].mxu0
    %159 = vdwg.mxu0
    %v160 = vmax.f32 %v130, 0.0
    %v161 = vmax.f32 %v133, 0.0
    %v162 = vmax.f32 %v138, 0.0
    %v163 = vmax.f32 %v141, 0.0
    %v164 = vmax.f32 %v146, 0.0
    %v165 = vmax.f32 %v149, 0.0
    %v166 = vmax.f32 %v154, 0.0
    %v167 = vmax.f32 %v157, 0.0
    %v168 = vpack.c.bf16 %v161, %v160
    %v169 = vpack.c.bf16 %v163, %v162
    %v170 = vpack.c.bf16 %v165, %v164
    %v171 = vpack.c.bf16 %v167, %v166
    %v172 = vld [vmem:[%s4] sm:$0xf]
    %v173 = vld [vmem:[%s4 + $0x4] sm:$0xf]
    %v174 = vld [vmem:[%s4 + $0x8] sm:$0xf]
    %v175 = vld [vmem:[%s4 + $0xc] sm:$0xf]
    %v176 = vld [vmem:[%s4 + $0x10] sm:$0xf]
    %v177 = vld [vmem:[%s4 + $0x14] sm:$0xf]
    %v178 = vld [vmem:[%s4 + $0x18] sm:$0xf]
    %v179 = vld [vmem:[%s4 + $0x1c] sm:$0xf]
    %v180 = vld [vmem:[%s4 + $0x20] sm:$0xf]
    %v181 = vld [vmem:[%s4 + $0x24] sm:$0xf]
    %v182 = vld [vmem:[%s4 + $0x28] sm:$0xf]
    %v183 = vld [vmem:[%s4 + $0x2c] sm:$0xf]
    %v184 = vld [vmem:[%s4 + $0x30] sm:$0xf]
    %v185 = vld [vmem:[%s4 + $0x34] sm:$0xf]
    %v186 = vld [vmem:[%s4 + $0x38] sm:$0xf]
    %v187 = vld [vmem:[%s4 + $0x3c] sm:$0xf]
    %v188 = vld [vmem:[%s5] sm:$0x1]
    %v190 = vlaneseq
    %v191 = vshrl.u32 %v190, 7
    %v192 = vsub.s32 0, %v191
    %v193 = vrot.slane %v188, %v192
    %v211 = vunpack.c.l.b16 %v172
    %v212 = vunpack.c.l.b16 %v173
    %v213 = vunpack.c.l.b16 %v174
    %v214 = vunpack.c.l.b16 %v175
    %v215 = vunpack.c.l.b16 %v176
    %v216 = vunpack.c.l.b16 %v177
    %v217 = vunpack.c.l.b16 %v178
    %v218 = vunpack.c.l.b16 %v179
    %v219 = vunpack.c.l.b16 %v180
    %v220 = vunpack.c.l.b16 %v181
    %v221 = vunpack.c.l.b16 %v182
    %v222 = vunpack.c.l.b16 %v183
    %v223 = vunpack.c.l.b16 %v184
    %v224 = vunpack.c.l.b16 %v185
    %v225 = vunpack.c.l.b16 %v186
    %v226 = vunpack.c.l.b16 %v187
    %v227 = vpack.c.b16 %v212, %v211
    %v228 = vpack.c.b16 %v214, %v213
    %v229 = vpack.c.b16 %v216, %v215
    %v230 = vpack.c.b16 %v218, %v217
    %v231 = vpack.c.b16 %v220, %v219
    %v232 = vpack.c.b16 %v222, %v221
    %v233 = vpack.c.b16 %v224, %v223
    %v234 = vpack.c.b16 %v226, %v225
    %243 = vmatprep.subr.bf16.mxu0 0
    %244 = vmatpush1.bf16.msra.mxu0 %v227
    %245 = vmatprep.subr.bf16.mxu0 0
    %246 = vmatpush1.bf16.msra.mxu0 %v228
    %247 = vmatprep.subr.bf16.mxu0 0
    %248 = vmatpush1.bf16.msra.mxu0 %v229
    %249 = vmatprep.subr.bf16.mxu0 0
    %250 = vmatpush1.bf16.msra.mxu0 %v230
    %251 = vmatprep.subr.bf16.mxu0 0
    %252 = vmatpush1.bf16.msra.mxu0 %v231
    %253 = vmatprep.subr.bf16.mxu0 0
    %254 = vmatpush1.bf16.msra.mxu0 %v232
    %255 = vmatprep.subr.bf16.mxu0 0
    %256 = vmatpush1.bf16.msra.mxu0 %v233
    %257 = vmatprep.subr.bf16.mxu0 0
    %258 = vmatpush1.bf16.msra.mxu0 %v234
    %259 = vmatprep.subr.bf16.mxu0 0
    %260 = vmatpush1.bf16.msra.mxu0 0
    %261 = vmatprep.subr.bf16.mxu0 0
    %262 = vmatpush1.bf16.msra.mxu0 0
    %263 = vmatprep.subr.bf16.mxu0 0
    %264 = vmatpush1.bf16.msra.mxu0 0
    %265 = vmatprep.subr.bf16.mxu0 0
    %266 = vmatpush1.bf16.msra.mxu0 0
    %267 = vmatprep.subr.bf16.mxu0 0
    %268 = vmatpush1.bf16.msra.mxu0 0
    %269 = vmatprep.subr.bf16.mxu0 0
    %270 = vmatpush1.bf16.msra.mxu0 0
    %271 = vmatprep.subr.bf16.mxu0 0
    %272 = vmatpush1.bf16.msra.mxu0 0
    %273 = vmatprep.subr.bf16.mxu0 0
    %274 = vmatpush1.bf16.msra.mxu0 0
    %275 = vmatprep.mubr.bf16.mxu0 0
    %276 = vmatmul.mubr.bf16.gmra.mrb[0].mxu0 %v168
    %v277 = vpop.f32.mrb[0].mxu0
    %v278 = vadd.f32 %v193, %v277
    %v279 = vpop.f32.mrb[0].mxu0
    %v280 = vpop.f32.mrb[0].mxu0
    %v281 = vadd.f32 %v193, %v280
    %v282 = vpop.f32.mrb[0].mxu0
    %283 = vmatprep.mubr.bf16.mxu0 0
    %284 = vmatmul.mubr.bf16.gmra.mrb[0].mxu0 %v169
    %v285 = vpop.f32.mrb[0].mxu0
    %v286 = vadd.f32 %v193, %v285
    %v287 = vpop.f32.mrb[0].mxu0
    %v288 = vpop.f32.mrb[0].mxu0
    %v289 = vadd.f32 %v193, %v288
    %v290 = vpop.f32.mrb[0].mxu0
    %291 = vmatprep.mubr.bf16.mxu0 0
    %292 = vmatmul.mubr.bf16.gmra.mrb[0].mxu0 %v170
    %v293 = vpop.f32.mrb[0].mxu0
    %v294 = vadd.f32 %v193, %v293
    %v295 = vpop.f32.mrb[0].mxu0
    %v296 = vpop.f32.mrb[0].mxu0
    %v297 = vadd.f32 %v193, %v296
    %v298 = vpop.f32.mrb[0].mxu0
    %299 = vmatprep.mubr.bf16.mxu0 0
    %300 = vmatmul.mubr.bf16.gmra.mrb[0].mxu0 %v171
    %v301 = vpop.f32.mrb[0].mxu0
    %v302 = vadd.f32 %v193, %v301
    %v303 = vpop.f32.mrb[0].mxu0
    %v304 = vpop.f32.mrb[0].mxu0
    %v305 = vadd.f32 %v193, %v304
    %v306 = vpop.f32.mrb[0].mxu0
    %307 = vdwg.mxu0
    %v308 = vld [vmem:[%s1] sm:$0xff]
    %v309 = vld [vmem:[%s1 + $0x8] sm:$0xff]
    %v310 = vld [vmem:[%s1 + $0x10] sm:$0xff]
    %v311 = vld [vmem:[%s1 + $0x18] sm:$0xff]
    %v312 = vld [vmem:[%s1 + $0x20] sm:$0xff]
    %v313 = vld [vmem:[%s1 + $0x28] sm:$0xff]
    %v314 = vld [vmem:[%s1 + $0x30] sm:$0xff]
    %v315 = vld [vmem:[%s1 + $0x38] sm:$0xff]
    %v316 = vadd.f32 %v278, %v308
    %v317 = vadd.f32 %v281, %v309
    %v318 = vadd.f32 %v286, %v310
    %v319 = vadd.f32 %v289, %v311
    %v320 = vadd.f32 %v294, %v312
    %v321 = vadd.f32 %v297, %v313
    %v322 = vadd.f32 %v302, %v314
    %v323 = vadd.f32 %v305, %v315
    %v324 = vpack.c.bf16 %v317, %v316
    %v325 = vpack.c.bf16 %v319, %v318
    %v326 = vpack.c.bf16 %v321, %v320
    %v327 = vpack.c.bf16 %v323, %v322
    %v328 = vld [vmem:[%s6] sm:$0xf]
    %v329 = vld [vmem:[%s6 + $0x4] sm:$0xf]
    %v330 = vld [vmem:[%s6 + $0x8] sm:$0xf]
    %v331 = vld [vmem:[%s6 + $0xc] sm:$0xf]
    %v336 = vunpack.c.l.b16 %v328
    %v337 = vunpack.c.l.b16 %v329
    %v338 = vunpack.c.l.b16 %v330
    %v339 = vunpack.c.l.b16 %v331
    %v340 = vpack.c.b16 %v337, %v336
    %v341 = vpack.c.b16 %v339, %v338
    %vm344 = vcmask 261120
    %v346 = vsel %vm344, %v324, 0
    %v349 = vsel %vm344, %v325, 0
    %v352 = vsel %vm344, %v326, 0
    %v355 = vsel %vm344, %v327, 0
    %357 = vmatprep.subr.bf16.mxu0 0
    %358 = vmatpush1.bf16.msra.mxu0 %v340
    %359 = vmatprep.subr.bf16.mxu0 0
    %360 = vmatpush1.bf16.msra.mxu0 %v341
    %361 = vmatprep.subr.bf16.mxu0 0
    %362 = vmatpush1.bf16.msra.mxu0 0
    %363 = vmatprep.subr.bf16.mxu0 0
    %364 = vmatpush1.bf16.msra.mxu0 0
    %365 = vmatprep.subr.bf16.mxu0 0
    %366 = vmatpush1.bf16.msra.mxu0 0
    %367 = vmatprep.subr.bf16.mxu0 0
    %368 = vmatpush1.bf16.msra.mxu0 0
    %369 = vmatprep.subr.bf16.mxu0 0
    %370 = vmatpush1.bf16.msra.mxu0 0
    %371 = vmatprep.subr.bf16.mxu0 0
    %372 = vmatpush1.bf16.msra.mxu0 0
    %373 = vmatprep.subr.bf16.mxu0 0
    %374 = vmatpush1.bf16.msra.mxu0 0
    %375 = vmatprep.subr.bf16.mxu0 0
    %376 = vmatpush1.bf16.msra.mxu0 0
    %377 = vmatprep.subr.bf16.mxu0 0
    %378 = vmatpush1.bf16.msra.mxu0 0
    %379 = vmatprep.subr.bf16.mxu0 0
    %380 = vmatpush1.bf16.msra.mxu0 0
    %381 = vmatprep.subr.bf16.mxu0 0
    %382 = vmatpush1.bf16.msra.mxu0 0
    %383 = vmatprep.subr.bf16.mxu0 0
    %384 = vmatpush1.bf16.msra.mxu0 0
    %385 = vmatprep.subr.bf16.mxu0 0
    %386 = vmatpush1.bf16.msra.mxu0 0
    %387 = vmatprep.subr.bf16.mxu0 0
    %388 = vmatpush1.bf16.msra.mxu0 0
    %389 = vmatprep.mubr.bf16.mxu0 0
    %390 = vmatmul.mubr.bf16.gmra.mrb[0].mxu0 %v346
    %v391 = vpop.f32.mrb[0].mxu0
    %v392 = vadd.f32 0.0, %v391
    %v393 = vpop.f32.mrb[0].mxu0
    %v394 = vpop.f32.mrb[0].mxu0
    %v395 = vadd.f32 0.0, %v394
    %v396 = vpop.f32.mrb[0].mxu0
    %397 = vmatprep.mubr.bf16.mxu0 0
    %398 = vmatmul.mubr.bf16.gmra.mrb[0].mxu0 %v349
    %v399 = vpop.f32.mrb[0].mxu0
    %v400 = vadd.f32 0.0, %v399
    %v401 = vpop.f32.mrb[0].mxu0
    %v402 = vpop.f32.mrb[0].mxu0
    %v403 = vadd.f32 0.0, %v402
    %v404 = vpop.f32.mrb[0].mxu0
    %405 = vmatprep.mubr.bf16.mxu0 0
    %406 = vmatmul.mubr.bf16.gmra.mrb[0].mxu0 %v352
    %v407 = vpop.f32.mrb[0].mxu0
    %v408 = vadd.f32 0.0, %v407
    %v409 = vpop.f32.mrb[0].mxu0
    %v410 = vpop.f32.mrb[0].mxu0
    %v411 = vadd.f32 0.0, %v410
    %v412 = vpop.f32.mrb[0].mxu0
    %413 = vmatprep.mubr.bf16.mxu0 0
    %414 = vmatmul.mubr.bf16.gmra.mrb[0].mxu0 %v355
    %v415 = vpop.f32.mrb[0].mxu0
    %v416 = vadd.f32 0.0, %v415
    %v417 = vpop.f32.mrb[0].mxu0
    %v418 = vpop.f32.mrb[0].mxu0
    %v419 = vadd.f32 0.0, %v418
    %v420 = vpop.f32.mrb[0].mxu0
    %421 = vdwg.mxu0
    %v422 = vpack.c.bf16 %v281, %v278
    %v423 = vpack.c.bf16 %v289, %v286
    %v424 = vpack.c.bf16 %v297, %v294
    %v425 = vpack.c.bf16 %v305, %v302
    %v426 = vld [vmem:[%s7] sm:$0xf]
    %v427 = vld [vmem:[%s7 + $0x4] sm:$0xf]
    %v428 = vld [vmem:[%s7 + $0x8] sm:$0xf]
    %v429 = vld [vmem:[%s7 + $0xc] sm:$0xf]
    %v434 = vunpack.c.l.b16 %v426
    %v435 = vunpack.c.l.b16 %v427
    %v436 = vunpack.c.l.b16 %v428
    %v437 = vunpack.c.l.b16 %v429
    %v438 = vpack.c.b16 %v435, %v434
    %v439 = vpack.c.b16 %v437, %v436
    %v443 = vsel %vm344, %v422, 0
    %v446 = vsel %vm344, %v423, 0
    %v449 = vsel %vm344, %v424, 0
    %v452 = vsel %vm344, %v425, 0
    %454 = vmatprep.subr.bf16.mxu0 0
    %455 = vmatpush1.bf16.msra.mxu0 %v438
    %456 = vmatprep.subr.bf16.mxu0 0
    %457 = vmatpush1.bf16.msra.mxu0 %v439
    %458 = vmatprep.subr.bf16.mxu0 0
    %459 = vmatpush1.bf16.msra.mxu0 0
    %460 = vmatprep.subr.bf16.mxu0 0
    %461 = vmatpush1.bf16.msra.mxu0 0
    %462 = vmatprep.subr.bf16.mxu0 0
    %463 = vmatpush1.bf16.msra.mxu0 0
    %464 = vmatprep.subr.bf16.mxu0 0
    %465 = vmatpush1.bf16.msra.mxu0 0
    %466 = vmatprep.subr.bf16.mxu0 0
    %467 = vmatpush1.bf16.msra.mxu0 0
    %468 = vmatprep.subr.bf16.mxu0 0
    %469 = vmatpush1.bf16.msra.mxu0 0
    %470 = vmatprep.subr.bf16.mxu0 0
    %471 = vmatpush1.bf16.msra.mxu0 0
    %472 = vmatprep.subr.bf16.mxu0 0
    %473 = vmatpush1.bf16.msra.mxu0 0
    %474 = vmatprep.subr.bf16.mxu0 0
    %475 = vmatpush1.bf16.msra.mxu0 0
    %476 = vmatprep.subr.bf16.mxu0 0
    %477 = vmatpush1.bf16.msra.mxu0 0
    %478 = vmatprep.subr.bf16.mxu0 0
    %479 = vmatpush1.bf16.msra.mxu0 0
    %480 = vmatprep.subr.bf16.mxu0 0
    %481 = vmatpush1.bf16.msra.mxu0 0
    %482 = vmatprep.subr.bf16.mxu0 0
    %483 = vmatpush1.bf16.msra.mxu0 0
    %484 = vmatprep.subr.bf16.mxu0 0
    %485 = vmatpush1.bf16.msra.mxu0 0
    %486 = vmatprep.mubr.bf16.mxu0 0
    %487 = vmatmul.mubr.bf16.gmra.mrb[0].mxu0 %v443
    %v488 = vpop.f32.mrb[0].mxu0
    %v489 = vadd.f32 0.0, %v488
    %v490 = vpop.f32.mrb[0].mxu0
    %v491 = vpop.f32.mrb[0].mxu0
    %v492 = vadd.f32 0.0, %v491
    %v493 = vpop.f32.mrb[0].mxu0
    %494 = vmatprep.mubr.bf16.mxu0 0
    %495 = vmatmul.mubr.bf16.gmra.mrb[0].mxu0 %v446
    %v496 = vpop.f32.mrb[0].mxu0
    %v497 = vadd.f32 0.0, %v496
    %v498 = vpop.f32.mrb[0].mxu0
    %v499 = vpop.f32.mrb[0].mxu0
    %v500 = vadd.f32 0.0, %v499
    %v501 = vpop.f32.mrb[0].mxu0
    %502 = vmatprep.mubr.bf16.mxu0 0
    %503 = vmatmul.mubr.bf16.gmra.mrb[0].mxu0 %v449
    %v504 = vpop.f32.mrb[0].mxu0
    %v505 = vadd.f32 0.0, %v504
    %v506 = vpop.f32.mrb[0].mxu0
    %v507 = vpop.f32.mrb[0].mxu0
    %v508 = vadd.f32 0.0, %v507
    %v509 = vpop.f32.mrb[0].mxu0
    %510 = vmatprep.mubr.bf16.mxu0 0
    %511 = vmatmul.mubr.bf16.gmra.mrb[0].mxu0 %v452
    %v512 = vpop.f32.mrb[0].mxu0
    %v513 = vadd.f32 0.0, %v512
    %v514 = vpop.f32.mrb[0].mxu0
    %v515 = vpop.f32.mrb[0].mxu0
    %v516 = vadd.f32 0.0, %v515
    %v517 = vpop.f32.mrb[0].mxu0
    %518 = vdwg.mxu0
    %527 = vrot.lane.b32.xlu0 %v489, 32
    %v528 = vpop.permute.xlu0 %527
    %529 = vrot.lane.b32.xlu0 %v492, 32
    %v530 = vpop.permute.xlu0 %529
    %531 = vrot.lane.b32.xlu0 %v497, 32
    %v532 = vpop.permute.xlu0 %531
    %533 = vrot.lane.b32.xlu0 %v500, 32
    %v534 = vpop.permute.xlu0 %533
    %535 = vrot.lane.b32.xlu0 %v505, 32
    %v536 = vpop.permute.xlu0 %535
    %537 = vrot.lane.b32.xlu0 %v508, 32
    %v538 = vpop.permute.xlu0 %537
    %539 = vrot.lane.b32.xlu0 %v513, 32
    %v540 = vpop.permute.xlu0 %539
    %541 = vrot.lane.b32.xlu0 %v516, 32
    %v542 = vpop.permute.xlu0 %541
    %v551 = vsel %vm344, %v392, %v528
    %v552 = vsel %vm344, %v395, %v530
    %v553 = vsel %vm344, %v400, %v532
    %v554 = vsel %vm344, %v403, %v534
    %v555 = vsel %vm344, %v408, %v536
    %v556 = vsel %vm344, %v411, %v538
    %v557 = vsel %vm344, %v416, %v540
    %v558 = vsel %vm344, %v419, %v542
    %v559 = vpack.c.bf16 %v552, %v551
    %v560 = vpack.c.bf16 %v554, %v553
    %v561 = vpack.c.bf16 %v556, %v555
    %v562 = vpack.c.bf16 %v558, %v557
    %v567 = vunpack.c.l.b16 %v559
    %v568 = vunpack.c.h.b16 %v559
    %v569 = vunpack.c.l.b16 %v560
    %v570 = vunpack.c.h.b16 %v560
    %v571 = vunpack.c.l.b16 %v561
    %v572 = vunpack.c.h.b16 %v561
    %v573 = vunpack.c.l.b16 %v562
    %v574 = vunpack.c.h.b16 %v562
    %v575 = vpack.c.b16 %v567, %v567
    %v576 = vpack.c.b16 %v568, %v568
    %v577 = vpack.c.b16 %v569, %v569
    %v578 = vpack.c.b16 %v570, %v570
    %v579 = vpack.c.b16 %v571, %v571
    %v580 = vpack.c.b16 %v572, %v572
    %v581 = vpack.c.b16 %v573, %v573
    %v582 = vpack.c.b16 %v574, %v574
    %vm591 = vcmask 519168
    %592 = vst.msk [vmem:[#allocation2] sm:$0xf] %vm591, %v575
    %593 = vst.msk [vmem:[#allocation2 + $0x4] sm:$0xf] %vm591, %v576
    %594 = vst.msk [vmem:[#allocation2 + $0x8] sm:$0xf] %vm591, %v577
    %595 = vst.msk [vmem:[#allocation2 + $0xc] sm:$0xf] %vm591, %v578
    %596 = vst.msk [vmem:[#allocation2 + $0x10] sm:$0xf] %vm591, %v579
    %597 = vst.msk [vmem:[#allocation2 + $0x14] sm:$0xf] %vm591, %v580
    %598 = vst.msk [vmem:[#allocation2 + $0x18] sm:$0xf] %vm591, %v581
    %599 = vst.msk [vmem:[#allocation2 + $0x1c] sm:$0xf] %vm591, %v582
    // Predicated region
    $region34: #{tpu_custom_call.1} parent=1 // pred_check
      _
    $region35: #{tpu_custom_call.1} parent=1 // pred_check_branch
      %601 = sbr.rel (0) target = $region37
    $region36: #{tpu_custom_call.1} parent=1 // pred_region
      %s603 = ssub.s32 512, 512
      %604 = vsyncadd [#allocation3], %s603
      %s605 = sshll.u32 [#allocation2], 4
      %s606 = int_to_ptr.vmem [resolvable:$true] %s605
      %611 = dma.vmem_to_hbm [thread:$0]  %s606, 512, %s8, [#allocation3], 64, 64, 4
    $region37: #{tpu_custom_call.1} parent=1 // pred_fallthru
      _
    // Predicated region
    $region38: #{tpu_custom_call.1} parent=1 // pred_check
      _
    $region39: #{tpu_custom_call.1} parent=1 // pred_check_branch
      %613 = sbr.rel (0) target = $region41
    $region40: #{tpu_custom_call.1} parent=1 // pred_region
      %614 = dma.done [#allocation3], 512
    $region41: #{tpu_custom_call.1} parent=1 // pred_fallthru
      _
    %615 = vsyncpa [#allocation3], 1

</llo_original>
